<compile_context>
chip_gen: v5e
topology: v5e:2x2
jax: 0.10.0
libtpu: 0.0.40
codegen_flags: <defaults>
</compile_context>

<pallas_src>
import math

import jax
import jax.numpy as jnp
from jax.experimental import pallas as pl
from jax.experimental.pallas import tpu as pltpu


# ------------------------------ Pallas kernel ------------------------------

def _fused_transition_kernel(pm_ref, wc_ref, bc_ref, wf_ref, bf_ref, o_ref):
    """out = sigmoid( flatten(conv(patches)) @ Wf + bf ), conv = patches @ Wc + bc.

    pm_ref : (P, TB, K)    im2col patches, patch-major, feature order (C,kh,kw)
    wc_ref : (K, CO)       conv weight
    bc_ref : (1, CO)       conv bias
    wf_ref : (P, CO, OUT)  fc weight, pre-permuted so the PyTorch flatten
                           order (CO, OH, OW) is realised implicitly
    bf_ref : (1, OUT)      fc bias
    o_ref  : (TB, OUT)
    """
    P = pm_ref.shape[0]
    wc = wc_ref[...]                      # hoisted: reused by every patch
    bc = bc_ref[...]
    acc = jnp.zeros(o_ref.shape, jnp.float32)
    for p in range(P):                    # P is small & static -> fully unrolled
        # conv output for patch p, all batch rows: (TB, CO); stays in vregs.
        conv_p = jnp.dot(pm_ref[p], wc, preferred_element_type=jnp.float32) + bc
        # its contribution to the fc layer: (TB, OUT)
        acc = acc + jnp.dot(conv_p, wf_ref[p], preferred_element_type=jnp.float32)
    o_ref[...] = jax.nn.sigmoid(acc + bf_ref[...]).astype(o_ref.dtype)


# ------------------------------ module wrapper ------------------------------

class TransitionNetworkPallas:
    """Mirrors torch TransitionNetwork(state_dimension) with synthetic params."""

    KSIZE = 8
    STRIDE = 4
    CO = 16

    def __init__(self, state_dimension, key):
        C, H, W = state_dimension
        assert C == 1, "torch.cat in the original forward requires channel dim == 1"
        self.C, self.H, self.W = C, H, W
        sa_H = H + 1                                     # action row appended
        self.OH = (sa_H - self.KSIZE) // self.STRIDE + 1
        self.OW = (W - self.KSIZE) // self.STRIDE + 1
        self.P = self.OH * self.OW
        self.K = C * self.KSIZE * self.KSIZE
        self.out_dim = H * W
        feat_in = self.P * self.CO

        k1, k2 = jax.random.split(key)
        ortho = jax.nn.initializers.orthogonal
        # Native PyTorch-layout parameters (kept for the reference check).
        self.conv_w = ortho(scale=math.sqrt(2.0))(
            k1, (self.CO, C, self.KSIZE, self.KSIZE), jnp.float32)
        self.conv_b = jnp.zeros((self.CO,), jnp.float32)
        self.fc_w = ortho(scale=0.01)(k2, (self.out_dim, feat_in), jnp.float32)
        self.fc_b = jnp.zeros((self.out_dim,), jnp.float32)

        # ---- baked kernel-friendly layouts (one-time init cost) ----
        # conv: (CO, C, kh, kw) -> (K, CO) with K ordered (C, kh, kw)
        self.wc2d = self.conv_w.reshape(self.CO, self.K).T
        self.bc2d = self.conv_b.reshape(1, self.CO)
        # fc: input features are PyTorch-flatten ordered (CO, OH, OW) = (CO, P).
        # Permute to (P, CO, OUT) so the kernel never transposes conv output.
        self.wf_pco = (self.fc_w.T
                       .reshape(self.CO, self.P, self.out_dim)
                       .transpose(1, 0, 2))
        self.bf2d = self.fc_b.reshape(1, self.out_dim)

        self._forward = jax.jit(self._forward_impl)

    # whole forward is jitted: one_hot / concat / im2col slices fuse in XLA,
    # the two matmuls + sigmoid run in one Pallas kernel.
    def _forward_impl(self, state, action):
        B = state.shape[0]
        W = state.shape[3]
        a1h = jax.nn.one_hot(action.astype(jnp.int32), W, dtype=state.dtype)
        sa = jnp.concatenate([state, a1h[:, None, None, :]], axis=2)  # (B,1,H+1,W)
        sa = sa[:, 0]                                                 # (B,H+1,W), C==1

        # im2col, patch-major: (P, B, K); feature order (kh, kw) == (C,kh,kw) for C=1.
        cols = []
        for oh in range(self.OH):
            for ow in range(self.OW):
                hs, ws = oh * self.STRIDE, ow * self.STRIDE
                cols.append(
                    sa[:, hs:hs + self.KSIZE, ws:ws + self.KSIZE].reshape(B, self.K))
        pm = jnp.stack(cols, axis=0)                                  # (P, B, K)

        TB = min(B, 128)                 # batch tile; single step at B=2
        grid = (pl.cdiv(B, TB),)
        out = pl.pallas_call(
            _fused_transition_kernel,
            grid=grid,
            out_shape=jax.ShapeDtypeStruct((B, self.out_dim), jnp.float32),
            in_specs=[
                pl.BlockSpec((self.P, TB, self.K), lambda i: (0, i, 0)),
                pl.BlockSpec((self.K, self.CO), lambda i: (0, 0)),
                pl.BlockSpec((1, self.CO), lambda i: (0, 0)),
                pl.BlockSpec((self.P, self.CO, self.out_dim), lambda i: (0, 0, 0)),
                pl.BlockSpec((1, self.out_dim), lambda i: (0, 0)),
            ],
            out_specs=pl.BlockSpec((TB, self.out_dim), lambda i: (i, 0)),
            compiler_params=pltpu.CompilerParams(
                dimension_semantics=("parallel",)),
        )(pm, self.wc2d, self.bc2d, self.wf_pco, self.bf2d)
        return out                                                    # (B, H*W)

    def __call__(self, state, action):
        return self._forward(state, action)


# ------------------------------ reference path ------------------------------

def _reference_forward(net, state, action):
    """Pure-JAX reference (XLA conv) for the correctness check."""
    W = state.shape[3]
    a1h = jax.nn.one_hot(action.astype(jnp.int32), W, dtype=state.dtype)[:, None, None, :]
    sa = jnp.concatenate([state, a1h], axis=2)
    conv = jax.lax.conv_general_dilated(
        sa, net.conv_w, window_strides=(4, 4), padding="VALID",
        dimension_numbers=("NCHW", "OIHW", "NCHW"))
    conv = conv + net.conv_b[None, :, None, None]
    flat = conv.reshape(conv.shape[0], -1)
    return jax.nn.sigmoid(flat @ net.fc_w.T + net.fc_b)


if __name__ == "__main__":
    key = jax.random.PRNGKey(0)
    kp, ks, ka = jax.random.split(key, 3)

    # state_dimension = (C, H, W); with the action row appended H+1 = 16,
    # conv1 output is 3x3x16 -> fc1 maps 144 -> H*W = 240.
    state_dimension = (1, 15, 16)
    B = 2

    net = TransitionNetworkPallas(state_dimension, kp)
    state = jax.random.uniform(ks, (B,) + state_dimension, jnp.float32)
    action = jax.random.randint(ka, (B,), 0, state_dimension[2], jnp.int32)

    out = jax.block_until_ready(net(state, action))
    ref = _reference_forward(net, state, action)

    assert out.shape == (B, state_dimension[1] * state_dimension[2])
    assert jnp.allclose(out, ref, atol=1e-5, rtol=1e-5)

    print("KERNEL_OK")
</pallas_src>

<mosaic_0001>
module attributes {stable_mosaic.version = 11 : i64} {
  func.func @_fused_transition_kernel(%arg0: i32, %arg1: memref<9x2x64xf32, #tpu.memory_space<vmem>>, %arg2: memref<64x16xf32, #tpu.memory_space<vmem>>, %arg3: memref<1x16xf32, #tpu.memory_space<vmem>>, %arg4: memref<9x16x240xf32, #tpu.memory_space<vmem>>, %arg5: memref<1x240xf32, #tpu.memory_space<vmem>>, %arg6: memref<2x240xf32, #tpu.memory_space<vmem>>) attributes {dimension_semantics = [#tpu.dimension_semantics<parallel>], iteration_bounds = array<i64: 1>, scalar_prefetch = 0 : i64, scratch_operands = 0 : i64, tpu.core_type = #tpu.core_type<tc>, window_params = [{transform_indices = @transform_0, window_bounds = array<i64: 9, 2, 64>}, {pipeline_mode = #tpu.pipeline_mode<synchronous>, transform_indices = @transform_1, window_bounds = array<i64: 64, 16>}, {pipeline_mode = #tpu.pipeline_mode<synchronous>, transform_indices = @transform_2, window_bounds = array<i64: 1, 16>}, {pipeline_mode = #tpu.pipeline_mode<synchronous>, transform_indices = @transform_3, window_bounds = array<i64: 9, 16, 240>}, {pipeline_mode = #tpu.pipeline_mode<synchronous>, transform_indices = @transform_4, window_bounds = array<i64: 1, 240>}, {transform_indices = @transform_5, window_bounds = array<i64: 2, 240>}]} {
    %c0 = arith.constant 0 : index
    %c0_0 = arith.constant 0 : index
    %0 = vector.load %arg2[%c0, %c0_0] : memref<64x16xf32, #tpu.memory_space<vmem>>, vector<64x16xf32>
    %c0_1 = arith.constant 0 : index
    %c0_2 = arith.constant 0 : index
    %1 = vector.load %arg3[%c0_1, %c0_2] : memref<1x16xf32, #tpu.memory_space<vmem>>, vector<1x16xf32>
    %cst = arith.constant 0.000000e+00 : f32
    %2 = vector.broadcast %cst : f32 to vector<2x240xf32>
    %c0_3 = arith.constant 0 : index
    %c0_4 = arith.constant 0 : index
    %c0_5 = arith.constant 0 : index
    %3 = vector.load %arg1[%c0_3, %c0_4, %c0_5] : memref<9x2x64xf32, #tpu.memory_space<vmem>>, vector<1x2x64xf32>
    %4 = vector.shape_cast %3 : vector<1x2x64xf32> to vector<2x64xf32>
    %cst_6 = arith.constant dense<0.000000e+00> : vector<2x16xf32>
    %5 = tpu.matmul %4, %0, %cst_6 {dimension_numbers = #tpu.dot_dimension_numbers<[1], [0], [0], [1], [0, 0, 1, 1], [], []>} : vector<2x64xf32>, vector<64x16xf32>, vector<2x16xf32> -> vector<2x16xf32>
    %6 = vector.broadcast %1 : vector<1x16xf32> to vector<2x16xf32>
    %7 = arith.addf %5, %6 : vector<2x16xf32>
    %c0_7 = arith.constant 0 : index
    %c0_8 = arith.constant 0 : index
    %c0_9 = arith.constant 0 : index
    %8 = vector.load %arg4[%c0_7, %c0_8, %c0_9] : memref<9x16x240xf32, #tpu.memory_space<vmem>>, vector<1x16x240xf32>
    %9 = vector.shape_cast %8 : vector<1x16x240xf32> to vector<16x240xf32>
    %cst_10 = arith.constant dense<0.000000e+00> : vector<2x240xf32>
    %10 = tpu.matmul %7, %9, %cst_10 {dimension_numbers = #tpu.dot_dimension_numbers<[1], [0], [0], [1], [0, 0, 1, 1], [], []>} : vector<2x16xf32>, vector<16x240xf32>, vector<2x240xf32> -> vector<2x240xf32>
    %11 = arith.addf %2, %10 : vector<2x240xf32>
    %c1 = arith.constant 1 : index
    %c0_11 = arith.constant 0 : index
    %c0_12 = arith.constant 0 : index
    %12 = vector.load %arg1[%c1, %c0_11, %c0_12] : memref<9x2x64xf32, #tpu.memory_space<vmem>>, vector<1x2x64xf32>
    %13 = vector.shape_cast %12 : vector<1x2x64xf32> to vector<2x64xf32>
    %cst_13 = arith.constant dense<0.000000e+00> : vector<2x16xf32>
    %14 = tpu.matmul %13, %0, %cst_13 {dimension_numbers = #tpu.dot_dimension_numbers<[1], [0], [0], [1], [0, 0, 1, 1], [], []>} : vector<2x64xf32>, vector<64x16xf32>, vector<2x16xf32> -> vector<2x16xf32>
    %15 = vector.broadcast %1 : vector<1x16xf32> to vector<2x16xf32>
    %16 = arith.addf %14, %15 : vector<2x16xf32>
    %c1_14 = arith.constant 1 : index
    %c0_15 = arith.constant 0 : index
    %c0_16 = arith.constant 0 : index
    %17 = vector.load %arg4[%c1_14, %c0_15, %c0_16] : memref<9x16x240xf32, #tpu.memory_space<vmem>>, vector<1x16x240xf32>
    %18 = vector.shape_cast %17 : vector<1x16x240xf32> to vector<16x240xf32>
    %cst_17 = arith.constant dense<0.000000e+00> : vector<2x240xf32>
    %19 = tpu.matmul %16, %18, %cst_17 {dimension_numbers = #tpu.dot_dimension_numbers<[1], [0], [0], [1], [0, 0, 1, 1], [], []>} : vector<2x16xf32>, vector<16x240xf32>, vector<2x240xf32> -> vector<2x240xf32>
    %20 = arith.addf %11, %19 : vector<2x240xf32>
    %c2 = arith.constant 2 : index
    %c0_18 = arith.constant 0 : index
    %c0_19 = arith.constant 0 : index
    %21 = vector.load %arg1[%c2, %c0_18, %c0_19] : memref<9x2x64xf32, #tpu.memory_space<vmem>>, vector<1x2x64xf32>
    %22 = vector.shape_cast %21 : vector<1x2x64xf32> to vector<2x64xf32>
    %cst_20 = arith.constant dense<0.000000e+00> : vector<2x16xf32>
    %23 = tpu.matmul %22, %0, %cst_20 {dimension_numbers = #tpu.dot_dimension_numbers<[1], [0], [0], [1], [0, 0, 1, 1], [], []>} : vector<2x64xf32>, vector<64x16xf32>, vector<2x16xf32> -> vector<2x16xf32>
    %24 = vector.broadcast %1 : vector<1x16xf32> to vector<2x16xf32>
    %25 = arith.addf %23, %24 : vector<2x16xf32>
    %c2_21 = arith.constant 2 : index
    %c0_22 = arith.constant 0 : index
    %c0_23 = arith.constant 0 : index
    %26 = vector.load %arg4[%c2_21, %c0_22, %c0_23] : memref<9x16x240xf32, #tpu.memory_space<vmem>>, vector<1x16x240xf32>
    %27 = vector.shape_cast %26 : vector<1x16x240xf32> to vector<16x240xf32>
    %cst_24 = arith.constant dense<0.000000e+00> : vector<2x240xf32>
    %28 = tpu.matmul %25, %27, %cst_24 {dimension_numbers = #tpu.dot_dimension_numbers<[1], [0], [0], [1], [0, 0, 1, 1], [], []>} : vector<2x16xf32>, vector<16x240xf32>, vector<2x240xf32> -> vector<2x240xf32>
    %29 = arith.addf %20, %28 : vector<2x240xf32>
    %c3 = arith.constant 3 : index
    %c0_25 = arith.constant 0 : index
    %c0_26 = arith.constant 0 : index
    %30 = vector.load %arg1[%c3, %c0_25, %c0_26] : memref<9x2x64xf32, #tpu.memory_space<vmem>>, vector<1x2x64xf32>
    %31 = vector.shape_cast %30 : vector<1x2x64xf32> to vector<2x64xf32>
    %cst_27 = arith.constant dense<0.000000e+00> : vector<2x16xf32>
    %32 = tpu.matmul %31, %0, %cst_27 {dimension_numbers = #tpu.dot_dimension_numbers<[1], [0], [0], [1], [0, 0, 1, 1], [], []>} : vector<2x64xf32>, vector<64x16xf32>, vector<2x16xf32> -> vector<2x16xf32>
    %33 = vector.broadcast %1 : vector<1x16xf32> to vector<2x16xf32>
    %34 = arith.addf %32, %33 : vector<2x16xf32>
    %c3_28 = arith.constant 3 : index
    %c0_29 = arith.constant 0 : index
    %c0_30 = arith.constant 0 : index
    %35 = vector.load %arg4[%c3_28, %c0_29, %c0_30] : memref<9x16x240xf32, #tpu.memory_space<vmem>>, vector<1x16x240xf32>
    %36 = vector.shape_cast %35 : vector<1x16x240xf32> to vector<16x240xf32>
    %cst_31 = arith.constant dense<0.000000e+00> : vector<2x240xf32>
    %37 = tpu.matmul %34, %36, %cst_31 {dimension_numbers = #tpu.dot_dimension_numbers<[1], [0], [0], [1], [0, 0, 1, 1], [], []>} : vector<2x16xf32>, vector<16x240xf32>, vector<2x240xf32> -> vector<2x240xf32>
    %38 = arith.addf %29, %37 : vector<2x240xf32>
    %c4 = arith.constant 4 : index
    %c0_32 = arith.constant 0 : index
    %c0_33 = arith.constant 0 : index
    %39 = vector.load %arg1[%c4, %c0_32, %c0_33] : memref<9x2x64xf32, #tpu.memory_space<vmem>>, vector<1x2x64xf32>
    %40 = vector.shape_cast %39 : vector<1x2x64xf32> to vector<2x64xf32>
    %cst_34 = arith.constant dense<0.000000e+00> : vector<2x16xf32>
    %41 = tpu.matmul %40, %0, %cst_34 {dimension_numbers = #tpu.dot_dimension_numbers<[1], [0], [0], [1], [0, 0, 1, 1], [], []>} : vector<2x64xf32>, vector<64x16xf32>, vector<2x16xf32> -> vector<2x16xf32>
    %42 = vector.broadcast %1 : vector<1x16xf32> to vector<2x16xf32>
    %43 = arith.addf %41, %42 : vector<2x16xf32>
    %c4_35 = arith.constant 4 : index
    %c0_36 = arith.constant 0 : index
    %c0_37 = arith.constant 0 : index
    %44 = vector.load %arg4[%c4_35, %c0_36, %c0_37] : memref<9x16x240xf32, #tpu.memory_space<vmem>>, vector<1x16x240xf32>
    %45 = vector.shape_cast %44 : vector<1x16x240xf32> to vector<16x240xf32>
    %cst_38 = arith.constant dense<0.000000e+00> : vector<2x240xf32>
    %46 = tpu.matmul %43, %45, %cst_38 {dimension_numbers = #tpu.dot_dimension_numbers<[1], [0], [0], [1], [0, 0, 1, 1], [], []>} : vector<2x16xf32>, vector<16x240xf32>, vector<2x240xf32> -> vector<2x240xf32>
    %47 = arith.addf %38, %46 : vector<2x240xf32>
    %c5 = arith.constant 5 : index
    %c0_39 = arith.constant 0 : index
    %c0_40 = arith.constant 0 : index
    %48 = vector.load %arg1[%c5, %c0_39, %c0_40] : memref<9x2x64xf32, #tpu.memory_space<vmem>>, vector<1x2x64xf32>
    %49 = vector.shape_cast %48 : vector<1x2x64xf32> to vector<2x64xf32>
    %cst_41 = arith.constant dense<0.000000e+00> : vector<2x16xf32>
    %50 = tpu.matmul %49, %0, %cst_41 {dimension_numbers = #tpu.dot_dimension_numbers<[1], [0], [0], [1], [0, 0, 1, 1], [], []>} : vector<2x64xf32>, vector<64x16xf32>, vector<2x16xf32> -> vector<2x16xf32>
    %51 = vector.broadcast %1 : vector<1x16xf32> to vector<2x16xf32>
    %52 = arith.addf %50, %51 : vector<2x16xf32>
    %c5_42 = arith.constant 5 : index
    %c0_43 = arith.constant 0 : index
    %c0_44 = arith.constant 0 : index
    %53 = vector.load %arg4[%c5_42, %c0_43, %c0_44] : memref<9x16x240xf32, #tpu.memory_space<vmem>>, vector<1x16x240xf32>
    %54 = vector.shape_cast %53 : vector<1x16x240xf32> to vector<16x240xf32>
    %cst_45 = arith.constant dense<0.000000e+00> : vector<2x240xf32>
    %55 = tpu.matmul %52, %54, %cst_45 {dimension_numbers = #tpu.dot_dimension_numbers<[1], [0], [0], [1], [0, 0, 1, 1], [], []>} : vector<2x16xf32>, vector<16x240xf32>, vector<2x240xf32> -> vector<2x240xf32>
    %56 = arith.addf %47, %55 : vector<2x240xf32>
    %c6 = arith.constant 6 : index
    %c0_46 = arith.constant 0 : index
    %c0_47 = arith.constant 0 : index
    %57 = vector.load %arg1[%c6, %c0_46, %c0_47] : memref<9x2x64xf32, #tpu.memory_space<vmem>>, vector<1x2x64xf32>
    %58 = vector.shape_cast %57 : vector<1x2x64xf32> to vector<2x64xf32>
    %cst_48 = arith.constant dense<0.000000e+00> : vector<2x16xf32>
    %59 = tpu.matmul %58, %0, %cst_48 {dimension_numbers = #tpu.dot_dimension_numbers<[1], [0], [0], [1], [0, 0, 1, 1], [], []>} : vector<2x64xf32>, vector<64x16xf32>, vector<2x16xf32> -> vector<2x16xf32>
    %60 = vector.broadcast %1 : vector<1x16xf32> to vector<2x16xf32>
    %61 = arith.addf %59, %60 : vector<2x16xf32>
    %c6_49 = arith.constant 6 : index
    %c0_50 = arith.constant 0 : index
    %c0_51 = arith.constant 0 : index
    %62 = vector.load %arg4[%c6_49, %c0_50, %c0_51] : memref<9x16x240xf32, #tpu.memory_space<vmem>>, vector<1x16x240xf32>
    %63 = vector.shape_cast %62 : vector<1x16x240xf32> to vector<16x240xf32>
    %cst_52 = arith.constant dense<0.000000e+00> : vector<2x240xf32>
    %64 = tpu.matmul %61, %63, %cst_52 {dimension_numbers = #tpu.dot_dimension_numbers<[1], [0], [0], [1], [0, 0, 1, 1], [], []>} : vector<2x16xf32>, vector<16x240xf32>, vector<2x240xf32> -> vector<2x240xf32>
    %65 = arith.addf %56, %64 : vector<2x240xf32>
    %c7 = arith.constant 7 : index
    %c0_53 = arith.constant 0 : index
    %c0_54 = arith.constant 0 : index
    %66 = vector.load %arg1[%c7, %c0_53, %c0_54] : memref<9x2x64xf32, #tpu.memory_space<vmem>>, vector<1x2x64xf32>
    %67 = vector.shape_cast %66 : vector<1x2x64xf32> to vector<2x64xf32>
    %cst_55 = arith.constant dense<0.000000e+00> : vector<2x16xf32>
    %68 = tpu.matmul %67, %0, %cst_55 {dimension_numbers = #tpu.dot_dimension_numbers<[1], [0], [0], [1], [0, 0, 1, 1], [], []>} : vector<2x64xf32>, vector<64x16xf32>, vector<2x16xf32> -> vector<2x16xf32>
    %69 = vector.broadcast %1 : vector<1x16xf32> to vector<2x16xf32>
    %70 = arith.addf %68, %69 : vector<2x16xf32>
    %c7_56 = arith.constant 7 : index
    %c0_57 = arith.constant 0 : index
    %c0_58 = arith.constant 0 : index
    %71 = vector.load %arg4[%c7_56, %c0_57, %c0_58] : memref<9x16x240xf32, #tpu.memory_space<vmem>>, vector<1x16x240xf32>
    %72 = vector.shape_cast %71 : vector<1x16x240xf32> to vector<16x240xf32>
    %cst_59 = arith.constant dense<0.000000e+00> : vector<2x240xf32>
    %73 = tpu.matmul %70, %72, %cst_59 {dimension_numbers = #tpu.dot_dimension_numbers<[1], [0], [0], [1], [0, 0, 1, 1], [], []>} : vector<2x16xf32>, vector<16x240xf32>, vector<2x240xf32> -> vector<2x240xf32>
    %74 = arith.addf %65, %73 : vector<2x240xf32>
    %c8 = arith.constant 8 : index
    %c0_60 = arith.constant 0 : index
    %c0_61 = arith.constant 0 : index
    %75 = vector.load %arg1[%c8, %c0_60, %c0_61] : memref<9x2x64xf32, #tpu.memory_space<vmem>>, vector<1x2x64xf32>
    %76 = vector.shape_cast %75 : vector<1x2x64xf32> to vector<2x64xf32>
    %cst_62 = arith.constant dense<0.000000e+00> : vector<2x16xf32>
    %77 = tpu.matmul %76, %0, %cst_62 {dimension_numbers = #tpu.dot_dimension_numbers<[1], [0], [0], [1], [0, 0, 1, 1], [], []>} : vector<2x64xf32>, vector<64x16xf32>, vector<2x16xf32> -> vector<2x16xf32>
    %78 = vector.broadcast %1 : vector<1x16xf32> to vector<2x16xf32>
    %79 = arith.addf %77, %78 : vector<2x16xf32>
    %c8_63 = arith.constant 8 : index
    %c0_64 = arith.constant 0 : index
    %c0_65 = arith.constant 0 : index
    %80 = vector.load %arg4[%c8_63, %c0_64, %c0_65] : memref<9x16x240xf32, #tpu.memory_space<vmem>>, vector<1x16x240xf32>
    %81 = vector.shape_cast %80 : vector<1x16x240xf32> to vector<16x240xf32>
    %cst_66 = arith.constant dense<0.000000e+00> : vector<2x240xf32>
    %82 = tpu.matmul %79, %81, %cst_66 {dimension_numbers = #tpu.dot_dimension_numbers<[1], [0], [0], [1], [0, 0, 1, 1], [], []>} : vector<2x16xf32>, vector<16x240xf32>, vector<2x240xf32> -> vector<2x240xf32>
    %83 = arith.addf %74, %82 : vector<2x240xf32>
    %c0_67 = arith.constant 0 : index
    %c0_68 = arith.constant 0 : index
    %84 = vector.load %arg5[%c0_67, %c0_68] : memref<1x240xf32, #tpu.memory_space<vmem>>, vector<1x240xf32>
    %85 = vector.broadcast %84 : vector<1x240xf32> to vector<2x240xf32>
    %86 = arith.addf %83, %85 : vector<2x240xf32>
    %87 = arith.negf %86 : vector<2x240xf32>
    %88 = math.exp %87 : vector<2x240xf32>
    %cst_69 = arith.constant 1.000000e+00 : f32
    %89 = vector.broadcast %cst_69 : f32 to vector<2x240xf32>
    %90 = arith.addf %89, %88 : vector<2x240xf32>
    %91 = arith.divf %89, %90 : vector<2x240xf32>
    %c0_70 = arith.constant 0 : index
    %c0_71 = arith.constant 0 : index
    %92 = vector.load %arg6[%c0_70, %c0_71] : memref<2x240xf32, #tpu.memory_space<vmem>>, vector<2x240xf32>
    tpu.vector_store %arg6[%c0_70, %c0_71], %91 {strides = array<i32>} : memref<2x240xf32, #tpu.memory_space<vmem>>, vector<2x240xf32>,
    return
  }
  func.func @transform_0(%arg0: i32) -> (i32, i32, i32) {
    %c0_i32 = arith.constant 0 : i32
    %c0_i32_0 = arith.constant 0 : i32
    %c0_i32_1 = arith.constant 0 : i32
    return %c0_i32, %arg0, %c0_i32_0 : i32, i32, i32
  }
  func.func @transform_1(%arg0: i32) -> (i32, i32) {
    %c0_i32 = arith.constant 0 : i32
    %c0_i32_0 = arith.constant 0 : i32
    %c0_i32_1 = arith.constant 0 : i32
    return %c0_i32, %c0_i32_0 : i32, i32
  }
  func.func @transform_2(%arg0: i32) -> (i32, i32) {
    %c0_i32 = arith.constant 0 : i32
    %c0_i32_0 = arith.constant 0 : i32
    %c0_i32_1 = arith.constant 0 : i32
    return %c0_i32, %c0_i32_0 : i32, i32
  }
  func.func @transform_3(%arg0: i32) -> (i32, i32, i32) {
    %c0_i32 = arith.constant 0 : i32
    %c0_i32_0 = arith.constant 0 : i32
    %c0_i32_1 = arith.constant 0 : i32
    %c0_i32_2 = arith.constant 0 : i32
    return %c0_i32, %c0_i32_0, %c0_i32_1 : i32, i32, i32
  }
  func.func @transform_4(%arg0: i32) -> (i32, i32) {
    %c0_i32 = arith.constant 0 : i32
    %c0_i32_0 = arith.constant 0 : i32
    %c0_i32_1 = arith.constant 0 : i32
    return %c0_i32, %c0_i32_0 : i32, i32
  }
  func.func @transform_5(%arg0: i32) -> (i32, i32) {
    %c0_i32 = arith.constant 0 : i32
    %c0_i32_0 = arith.constant 0 : i32
    return %arg0, %c0_i32 : i32, i32
  }
}

</mosaic_0001>

<llo_original>
// kernel: _forward_impl.1
$region0: #{_forward_impl.1}
  #allocation0 [shape = 'u32[]', space=smem, size = 0x4, offset = 0x4, fixed_abs, tag = 'smem constant byte address 0x4 - core index']
  #allocation1 [shape = 'u32[72,128]{1,0:T(1,128)}', space=vmem, size = 0x9000, scoped, tag = 'internal scratch']
  %s0 = inlined_call_operand.vmem [shape: f32[9,2,64], index: 0, kind: input, shape index: {}]
  %s1 = inlined_call_operand.vmem [shape: f32[64,16], index: 1, kind: input, shape index: {}]
  %s2 = inlined_call_operand.vmem [shape: f32[1,16], index: 2, kind: input, shape index: {}]
  %s3 = inlined_call_operand.vmem [shape: f32[9,16,240], index: 3, kind: input, shape index: {}]
  %s4 = inlined_call_operand.vmem [shape: f32[1,240], index: 4, kind: input, shape index: {}]
  %s5 = inlined_call_operand.hbm [shape: f32[2,240], index: 5, kind: output, shape index: {}]
  %s6 = sld [smem:[#allocation0]]
  $region30: #{_forward_impl.1} parent=0
    _
  %s8 = ssub.s32 1, %s6
  %s9 = scalar_select 0, %s8, %s6
  $region1: #{_forward_impl.1} parent=0
    #allocation2 [shape = 'u8[2048]{0}', space=vmem, size = 0x800, scoped, tag = 'output window, operand 0, single buffered']
    #allocation3 [shape = 's32[1]{0}', space=sflag, size = 0x4, scoped, tag = 'scoped memory for _forward_impl.1']
    %10 = vsyncpa [#allocation3], 0
    // Predicated region
    $region2: #{_forward_impl.1} parent=1 // pred_check
      _
    $region3: #{_forward_impl.1} parent=1 // pred_check_branch
      %12 = sbr.rel (0) target = $region5
    $region4: #{_forward_impl.1} parent=1 // pred_region
      _
    $region5: #{_forward_impl.1} parent=1 // pred_fallthru
      _
    // Predicated region
    $region6: #{_forward_impl.1} parent=1 // pred_check
      _
    $region7: #{_forward_impl.1} parent=1 // pred_check_branch
      %14 = sbr.rel (0) target = $region9
    $region8: #{_forward_impl.1} parent=1 // pred_region
      _
    $region9: #{_forward_impl.1} parent=1 // pred_fallthru
      _
    // Predicated region
    $region10: #{_forward_impl.1} parent=1 // pred_check
      _
    $region11: #{_forward_impl.1} parent=1 // pred_check_branch
      %16 = sbr.rel (0) target = $region13
    $region12: #{_forward_impl.1} parent=1 // pred_region
      _
    $region13: #{_forward_impl.1} parent=1 // pred_fallthru
      _
    // Predicated region
    $region14: #{_forward_impl.1} parent=1 // pred_check
      _
    $region15: #{_forward_impl.1} parent=1 // pred_check_branch
      %18 = sbr.rel (0) target = $region17
    $region16: #{_forward_impl.1} parent=1 // pred_region
      _
    $region17: #{_forward_impl.1} parent=1 // pred_fallthru
      _
    // Predicated region
    $region18: #{_forward_impl.1} parent=1 // pred_check
      _
    $region19: #{_forward_impl.1} parent=1 // pred_check_branch
      %20 = sbr.rel (0) target = $region21
    $region20: #{_forward_impl.1} parent=1 // pred_region
      _
    $region21: #{_forward_impl.1} parent=1 // pred_fallthru
      _
    %v21 = vld [vmem:[%s1] sm:$0xff]
    %v22 = vld [vmem:[%s1 + $0x8] sm:$0xff]
    %v23 = vld [vmem:[%s1 + $0x10] sm:$0xff]
    %v24 = vld [vmem:[%s1 + $0x18] sm:$0xff]
    %v25 = vld [vmem:[%s1 + $0x20] sm:$0xff]
    %v26 = vld [vmem:[%s1 + $0x28] sm:$0xff]
    %v27 = vld [vmem:[%s1 + $0x30] sm:$0xff]
    %v28 = vld [vmem:[%s1 + $0x38] sm:$0xff]
    %v29 = vld [vmem:[%s2] sm:$0x1]
    %v30 = vld [vmem:[%s0] sm:$0x3]
    %v32 = vperm.slane %v29, 0
    %vm34 = vcmask 523264
    %v36 = vsel %vm34, %v30, 0
    %38 = vmatpush.msra.mxu0 0.0
    %39 = vmatpush.msra.mxu0 0.0
    %40 = vmatpush.msra.mxu0 0.0
    %41 = vmatpush.msra.mxu0 0.0
    %42 = vmatpush.msra.mxu0 0.0
    %43 = vmatpush.msra.mxu0 0.0
    %44 = vmatpush.msra.mxu0 0.0
    %45 = vmatpush.msra.mxu0 0.0
    %46 = vmatpush.msra.mxu0 %v28
    %47 = vmatpush.msra.mxu0 %v27
    %48 = vmatpush.msra.mxu0 %v26
    %49 = vmatpush.msra.mxu0 %v25
    %50 = vmatpush.msra.mxu0 %v24
    %51 = vmatpush.msra.mxu0 %v23
    %52 = vmatpush.msra.mxu0 %v22
    %53 = vmatpush.msra.mxu0 %v21
    %54 = vmatmul.f32.gmra.mxu0 %v36
    %v55 = vpop.f32.mrf.mxu0
    %v56 = vadd.f32 %v32, %v55
    %57 = vdwg.mxu0
    %v58 = vld [vmem:[%s3] sm:$0xff]
    %v59 = vld [vmem:[%s3 + $0x8] sm:$0xff]
    %v60 = vld [vmem:[%s3 + $0x10] sm:$0xff]
    %v61 = vld [vmem:[%s3 + $0x18] sm:$0xff]
    %s62 = scalar_lea.vmem %s0, 2
    %v63 = vld [vmem:[%s62] sm:$0x3]
    %v65 = vsel %vm34, %v63, 0
    %67 = vmatpush.msra.mxu0 0.0
    %68 = vmatpush.msra.mxu0 0.0
    %69 = vmatpush.msra.mxu0 0.0
    %70 = vmatpush.msra.mxu0 0.0
    %71 = vmatpush.msra.mxu0 0.0
    %72 = vmatpush.msra.mxu0 0.0
    %73 = vmatpush.msra.mxu0 0.0
    %74 = vmatpush.msra.mxu0 0.0
    %75 = vmatpush.msra.mxu0 %v28
    %76 = vmatpush.msra.mxu0 %v27
    %77 = vmatpush.msra.mxu0 %v26
    %78 = vmatpush.msra.mxu0 %v25
    %79 = vmatpush.msra.mxu0 %v24
    %80 = vmatpush.msra.mxu0 %v23
    %81 = vmatpush.msra.mxu0 %v22
    %82 = vmatpush.msra.mxu0 %v21
    %83 = vmatmul.f32.gmra.mxu0 %v65
    %v84 = vpop.f32.mrf.mxu0
    %v85 = vadd.f32 %v32, %v84
    %86 = vdwg.mxu0
    %s87 = scalar_lea.vmem %s3, 32
    %v88 = vld [vmem:[%s87] sm:$0xff]
    %v89 = vld [vmem:[%s87 + $0x8] sm:$0xff]
    %v90 = vld [vmem:[%s87 + $0x10] sm:$0xff]
    %v91 = vld [vmem:[%s87 + $0x18] sm:$0xff]
    %vm92 = vcmask 130048
    %v94 = vsel %vm92, %v85, 0
    %96 = vmatpush.msra.mxu0 0.0
    %97 = vmatpush.msra.mxu0 0.0
    %98 = vmatpush.msra.mxu0 0.0
    %99 = vmatpush.msra.mxu0 0.0
    %100 = vmatpush.msra.mxu0 0.0
    %101 = vmatpush.msra.mxu0 0.0
    %102 = vmatpush.msra.mxu0 0.0
    %103 = vmatpush.msra.mxu0 0.0
    %104 = vmatpush.msra.mxu0 0.0
    %105 = vmatpush.msra.mxu0 0.0
    %106 = vmatpush.msra.mxu0 0.0
    %107 = vmatpush.msra.mxu0 0.0
    %108 = vmatpush.msra.mxu0 0.0
    %109 = vmatpush.msra.mxu0 0.0
    %110 = vmatpush.msra.mxu0 %v90
    %111 = vmatpush.msra.mxu0 %v88
    %112 = vmatmul.f32.gmra.mxu0 %v94
    %v113 = vpop.f32.mrf.mxu0
    %v114 = vadd.f32 0.0, %v113
    %115 = vdwg.mxu0
    %116 = vmatpush.msra.mxu0 0.0
    %117 = vmatpush.msra.mxu0 0.0
    %118 = vmatpush.msra.mxu0 0.0
    %119 = vmatpush.msra.mxu0 0.0
    %120 = vmatpush.msra.mxu0 0.0
    %121 = vmatpush.msra.mxu0 0.0
    %122 = vmatpush.msra.mxu0 0.0
    %123 = vmatpush.msra.mxu0 0.0
    %124 = vmatpush.msra.mxu0 0.0
    %125 = vmatpush.msra.mxu0 0.0
    %126 = vmatpush.msra.mxu0 0.0
    %127 = vmatpush.msra.mxu0 0.0
    %128 = vmatpush.msra.mxu0 0.0
    %129 = vmatpush.msra.mxu0 0.0
    %130 = vmatpush.msra.mxu0 %v91
    %131 = vmatpush.msra.mxu0 %v89
    %132 = vmatmul.f32.gmra.mxu0 %v94
    %v133 = vpop.f32.mrf.mxu0
    %v134 = vadd.f32 0.0, %v133
    %135 = vdwg.mxu0
    %v137 = vsel %vm92, %v56, 0
    %139 = vmatpush.msra.mxu0 0.0
    %140 = vmatpush.msra.mxu0 0.0
    %141 = vmatpush.msra.mxu0 0.0
    %142 = vmatpush.msra.mxu0 0.0
    %143 = vmatpush.msra.mxu0 0.0
    %144 = vmatpush.msra.mxu0 0.0
    %145 = vmatpush.msra.mxu0 0.0
    %146 = vmatpush.msra.mxu0 0.0
    %147 = vmatpush.msra.mxu0 0.0
    %148 = vmatpush.msra.mxu0 0.0
    %149 = vmatpush.msra.mxu0 0.0
    %150 = vmatpush.msra.mxu0 0.0
    %151 = vmatpush.msra.mxu0 0.0
    %152 = vmatpush.msra.mxu0 0.0
    %153 = vmatpush.msra.mxu0 %v60
    %154 = vmatpush.msra.mxu0 %v58
    %155 = vmatmul.f32.gmra.mxu0 %v137
    %v156 = vpop.f32.mrf.mxu0
    %v157 = vadd.f32 %v114, %v156
    %158 = vdwg.mxu0
    %159 = vmatpush.msra.mxu0 0.0
    %160 = vmatpush.msra.mxu0 0.0
    %161 = vmatpush.msra.mxu0 0.0
    %162 = vmatpush.msra.mxu0 0.0
    %163 = vmatpush.msra.mxu0 0.0
    %164 = vmatpush.msra.mxu0 0.0
    %165 = vmatpush.msra.mxu0 0.0
    %166 = vmatpush.msra.mxu0 0.0
    %167 = vmatpush.msra.mxu0 0.0
    %168 = vmatpush.msra.mxu0 0.0
    %169 = vmatpush.msra.mxu0 0.0
    %170 = vmatpush.msra.mxu0 0.0
    %171 = vmatpush.msra.mxu0 0.0
    %172 = vmatpush.msra.mxu0 0.0
    %173 = vmatpush.msra.mxu0 %v61
    %174 = vmatpush.msra.mxu0 %v59
    %175 = vmatmul.f32.gmra.mxu0 %v137
    %v176 = vpop.f32.mrf.mxu0
    %v177 = vadd.f32 %v134, %v176
    %178 = vdwg.mxu0
    %s179 = scalar_lea.vmem %s0, 4
    %v180 = vld [vmem:[%s179] sm:$0x3]
    %v182 = vsel %vm34, %v180, 0
    %184 = vmatpush.msra.mxu0 0.0
    %185 = vmatpush.msra.mxu0 0.0
    %186 = vmatpush.msra.mxu0 0.0
    %187 = vmatpush.msra.mxu0 0.0
    %188 = vmatpush.msra.mxu0 0.0
    %189 = vmatpush.msra.mxu0 0.0
    %190 = vmatpush.msra.mxu0 0.0
    %191 = vmatpush.msra.mxu0 0.0
    %192 = vmatpush.msra.mxu0 %v28
    %193 = vmatpush.msra.mxu0 %v27
    %194 = vmatpush.msra.mxu0 %v26
    %195 = vmatpush.msra.mxu0 %v25
    %196 = vmatpush.msra.mxu0 %v24
    %197 = vmatpush.msra.mxu0 %v23
    %198 = vmatpush.msra.mxu0 %v22
    %199 = vmatpush.msra.mxu0 %v21
    %200 = vmatmul.f32.gmra.mxu0 %v182
    %v201 = vpop.f32.mrf.mxu0
    %v202 = vadd.f32 %v32, %v201
    %203 = vdwg.mxu0
    %s204 = scalar_lea.vmem %s3, 64
    %v205 = vld [vmem:[%s204] sm:$0xff]
    %v206 = vld [vmem:[%s204 + $0x8] sm:$0xff]
    %v207 = vld [vmem:[%s204 + $0x10] sm:$0xff]
    %v208 = vld [vmem:[%s204 + $0x18] sm:$0xff]
    %v210 = vsel %vm92, %v202, 0
    %212 = vmatpush.msra.mxu0 0.0
    %213 = vmatpush.msra.mxu0 0.0
    %214 = vmatpush.msra.mxu0 0.0
    %215 = vmatpush.msra.mxu0 0.0
    %216 = vmatpush.msra.mxu0 0.0
    %217 = vmatpush.msra.mxu0 0.0
    %218 = vmatpush.msra.mxu0 0.0
    %219 = vmatpush.msra.mxu0 0.0
    %220 = vmatpush.msra.mxu0 0.0
    %221 = vmatpush.msra.mxu0 0.0
    %222 = vmatpush.msra.mxu0 0.0
    %223 = vmatpush.msra.mxu0 0.0
    %224 = vmatpush.msra.mxu0 0.0
    %225 = vmatpush.msra.mxu0 0.0
    %226 = vmatpush.msra.mxu0 %v207
    %227 = vmatpush.msra.mxu0 %v205
    %228 = vmatmul.f32.gmra.mxu0 %v210
    %v229 = vpop.f32.mrf.mxu0
    %v230 = vadd.f32 0.0, %v229
    %231 = vdwg.mxu0
    %232 = vmatpush.msra.mxu0 0.0
    %233 = vmatpush.msra.mxu0 0.0
    %234 = vmatpush.msra.mxu0 0.0
    %235 = vmatpush.msra.mxu0 0.0
    %236 = vmatpush.msra.mxu0 0.0
    %237 = vmatpush.msra.mxu0 0.0
    %238 = vmatpush.msra.mxu0 0.0
    %239 = vmatpush.msra.mxu0 0.0
    %240 = vmatpush.msra.mxu0 0.0
    %241 = vmatpush.msra.mxu0 0.0
    %242 = vmatpush.msra.mxu0 0.0
    %243 = vmatpush.msra.mxu0 0.0
    %244 = vmatpush.msra.mxu0 0.0
    %245 = vmatpush.msra.mxu0 0.0
    %246 = vmatpush.msra.mxu0 %v208
    %247 = vmatpush.msra.mxu0 %v206
    %248 = vmatmul.f32.gmra.mxu0 %v210
    %v249 = vpop.f32.mrf.mxu0
    %v250 = vadd.f32 0.0, %v249
    %251 = vdwg.mxu0
    %v252 = vadd.f32 %v157, %v230
    %v253 = vadd.f32 %v177, %v250
    %s254 = scalar_lea.vmem %s0, 6
    %v255 = vld [vmem:[%s254] sm:$0x3]
    %v257 = vsel %vm34, %v255, 0
    %259 = vmatpush.msra.mxu0 0.0
    %260 = vmatpush.msra.mxu0 0.0
    %261 = vmatpush.msra.mxu0 0.0
    %262 = vmatpush.msra.mxu0 0.0
    %263 = vmatpush.msra.mxu0 0.0
    %264 = vmatpush.msra.mxu0 0.0
    %265 = vmatpush.msra.mxu0 0.0
    %266 = vmatpush.msra.mxu0 0.0
    %267 = vmatpush.msra.mxu0 %v28
    %268 = vmatpush.msra.mxu0 %v27
    %269 = vmatpush.msra.mxu0 %v26
    %270 = vmatpush.msra.mxu0 %v25
    %271 = vmatpush.msra.mxu0 %v24
    %272 = vmatpush.msra.mxu0 %v23
    %273 = vmatpush.msra.mxu0 %v22
    %274 = vmatpush.msra.mxu0 %v21
    %275 = vmatmul.f32.gmra.mxu0 %v257
    %v276 = vpop.f32.mrf.mxu0
    %v277 = vadd.f32 %v32, %v276
    %278 = vdwg.mxu0
    %s279 = scalar_lea.vmem %s3, 96
    %v280 = vld [vmem:[%s279] sm:$0xff]
    %v281 = vld [vmem:[%s279 + $0x8] sm:$0xff]
    %v282 = vld [vmem:[%s279 + $0x10] sm:$0xff]
    %v283 = vld [vmem:[%s279 + $0x18] sm:$0xff]
    %v285 = vsel %vm92, %v277, 0
    %287 = vmatpush.msra.mxu0 0.0
    %288 = vmatpush.msra.mxu0 0.0
    %289 = vmatpush.msra.mxu0 0.0
    %290 = vmatpush.msra.mxu0 0.0
    %291 = vmatpush.msra.mxu0 0.0
    %292 = vmatpush.msra.mxu0 0.0
    %293 = vmatpush.msra.mxu0 0.0
    %294 = vmatpush.msra.mxu0 0.0
    %295 = vmatpush.msra.mxu0 0.0
    %296 = vmatpush.msra.mxu0 0.0
    %297 = vmatpush.msra.mxu0 0.0
    %298 = vmatpush.msra.mxu0 0.0
    %299 = vmatpush.msra.mxu0 0.0
    %300 = vmatpush.msra.mxu0 0.0
    %301 = vmatpush.msra.mxu0 %v282
    %302 = vmatpush.msra.mxu0 %v280
    %303 = vmatmul.f32.gmra.mxu0 %v285
    %v304 = vpop.f32.mrf.mxu0
    %v305 = vadd.f32 0.0, %v304
    %306 = vdwg.mxu0
    %307 = vmatpush.msra.mxu0 0.0
    %308 = vmatpush.msra.mxu0 0.0
    %309 = vmatpush.msra.mxu0 0.0
    %310 = vmatpush.msra.mxu0 0.0
    %311 = vmatpush.msra.mxu0 0.0
    %312 = vmatpush.msra.mxu0 0.0
    %313 = vmatpush.msra.mxu0 0.0
    %314 = vmatpush.msra.mxu0 0.0
    %315 = vmatpush.msra.mxu0 0.0
    %316 = vmatpush.msra.mxu0 0.0
    %317 = vmatpush.msra.mxu0 0.0
    %318 = vmatpush.msra.mxu0 0.0
    %319 = vmatpush.msra.mxu0 0.0
    %320 = vmatpush.msra.mxu0 0.0
    %321 = vmatpush.msra.mxu0 %v283
    %322 = vmatpush.msra.mxu0 %v281
    %323 = vmatmul.f32.gmra.mxu0 %v285
    %v324 = vpop.f32.mrf.mxu0
    %v325 = vadd.f32 0.0, %v324
    %326 = vdwg.mxu0
    %v327 = vadd.f32 %v252, %v305
    %v328 = vadd.f32 %v253, %v325
    %s329 = scalar_lea.vmem %s0, 8
    %v330 = vld [vmem:[%s329] sm:$0x3]
    %v332 = vsel %vm34, %v330, 0
    %334 = vmatpush.msra.mxu0 0.0
    %335 = vmatpush.msra.mxu0 0.0
    %336 = vmatpush.msra.mxu0 0.0
    %337 = vmatpush.msra.mxu0 0.0
    %338 = vmatpush.msra.mxu0 0.0
    %339 = vmatpush.msra.mxu0 0.0
    %340 = vmatpush.msra.mxu0 0.0
    %341 = vmatpush.msra.mxu0 0.0
    %342 = vmatpush.msra.mxu0 %v28
    %343 = vmatpush.msra.mxu0 %v27
    %344 = vmatpush.msra.mxu0 %v26
    %345 = vmatpush.msra.mxu0 %v25
    %346 = vmatpush.msra.mxu0 %v24
    %347 = vmatpush.msra.mxu0 %v23
    %348 = vmatpush.msra.mxu0 %v22
    %349 = vmatpush.msra.mxu0 %v21
    %350 = vmatmul.f32.gmra.mxu0 %v332
    %v351 = vpop.f32.mrf.mxu0
    %v352 = vadd.f32 %v32, %v351
    %353 = vdwg.mxu0
    %s354 = scalar_lea.vmem %s3, 128
    %v355 = vld [vmem:[%s354] sm:$0xff]
    %v356 = vld [vmem:[%s354 + $0x8] sm:$0xff]
    %v357 = vld [vmem:[%s354 + $0x10] sm:$0xff]
    %v358 = vld [vmem:[%s354 + $0x18] sm:$0xff]
    %v360 = vsel %vm92, %v352, 0
    %362 = vmatpush.msra.mxu0 0.0
    %363 = vmatpush.msra.mxu0 0.0
    %364 = vmatpush.msra.mxu0 0.0
    %365 = vmatpush.msra.mxu0 0.0
    %366 = vmatpush.msra.mxu0 0.0
    %367 = vmatpush.msra.mxu0 0.0
    %368 = vmatpush.msra.mxu0 0.0
    %369 = vmatpush.msra.mxu0 0.0
    %370 = vmatpush.msra.mxu0 0.0
    %371 = vmatpush.msra.mxu0 0.0
    %372 = vmatpush.msra.mxu0 0.0
    %373 = vmatpush.msra.mxu0 0.0
    %374 = vmatpush.msra.mxu0 0.0
    %375 = vmatpush.msra.mxu0 0.0
    %376 = vmatpush.msra.mxu0 %v357
    %377 = vmatpush.msra.mxu0 %v355
    %378 = vmatmul.f32.gmra.mxu0 %v360
    %v379 = vpop.f32.mrf.mxu0
    %v380 = vadd.f32 0.0, %v379
    %381 = vdwg.mxu0
    %382 = vmatpush.msra.mxu0 0.0
    %383 = vmatpush.msra.mxu0 0.0
    %384 = vmatpush.msra.mxu0 0.0
    %385 = vmatpush.msra.mxu0 0.0
    %386 = vmatpush.msra.mxu0 0.0
    %387 = vmatpush.msra.mxu0 0.0
    %388 = vmatpush.msra.mxu0 0.0
    %389 = vmatpush.msra.mxu0 0.0
    %390 = vmatpush.msra.mxu0 0.0
    %391 = vmatpush.msra.mxu0 0.0
    %392 = vmatpush.msra.mxu0 0.0
    %393 = vmatpush.msra.mxu0 0.0
    %394 = vmatpush.msra.mxu0 0.0
    %395 = vmatpush.msra.mxu0 0.0
    %396 = vmatpush.msra.mxu0 %v358
    %397 = vmatpush.msra.mxu0 %v356
    %398 = vmatmul.f32.gmra.mxu0 %v360
    %v399 = vpop.f32.mrf.mxu0
    %v400 = vadd.f32 0.0, %v399
    %401 = vdwg.mxu0
    %v402 = vadd.f32 %v327, %v380
    %v403 = vadd.f32 %v328, %v400
    %s404 = scalar_lea.vmem %s0, 10
    %v405 = vld [vmem:[%s404] sm:$0x3]
    %v407 = vsel %vm34, %v405, 0
    %409 = vmatpush.msra.mxu0 0.0
    %410 = vmatpush.msra.mxu0 0.0
    %411 = vmatpush.msra.mxu0 0.0
    %412 = vmatpush.msra.mxu0 0.0
    %413 = vmatpush.msra.mxu0 0.0
    %414 = vmatpush.msra.mxu0 0.0
    %415 = vmatpush.msra.mxu0 0.0
    %416 = vmatpush.msra.mxu0 0.0
    %417 = vmatpush.msra.mxu0 %v28
    %418 = vmatpush.msra.mxu0 %v27
    %419 = vmatpush.msra.mxu0 %v26
    %420 = vmatpush.msra.mxu0 %v25
    %421 = vmatpush.msra.mxu0 %v24
    %422 = vmatpush.msra.mxu0 %v23
    %423 = vmatpush.msra.mxu0 %v22
    %424 = vmatpush.msra.mxu0 %v21
    %425 = vmatmul.f32.gmra.mxu0 %v407
    %v426 = vpop.f32.mrf.mxu0
    %v427 = vadd.f32 %v32, %v426
    %428 = vdwg.mxu0
    %s429 = scalar_lea.vmem %s3, 160
    %v430 = vld [vmem:[%s429] sm:$0xff]
    %v431 = vld [vmem:[%s429 + $0x8] sm:$0xff]
    %v432 = vld [vmem:[%s429 + $0x10] sm:$0xff]
    %v433 = vld [vmem:[%s429 + $0x18] sm:$0xff]
    %v435 = vsel %vm92, %v427, 0
    %437 = vmatpush.msra.mxu0 0.0
    %438 = vmatpush.msra.mxu0 0.0
    %439 = vmatpush.msra.mxu0 0.0
    %440 = vmatpush.msra.mxu0 0.0
    %441 = vmatpush.msra.mxu0 0.0
    %442 = vmatpush.msra.mxu0 0.0
    %443 = vmatpush.msra.mxu0 0.0
    %444 = vmatpush.msra.mxu0 0.0
    %445 = vmatpush.msra.mxu0 0.0
    %446 = vmatpush.msra.mxu0 0.0
    %447 = vmatpush.msra.mxu0 0.0
    %448 = vmatpush.msra.mxu0 0.0
    %449 = vmatpush.msra.mxu0 0.0
    %450 = vmatpush.msra.mxu0 0.0
    %451 = vmatpush.msra.mxu0 %v432
    %452 = vmatpush.msra.mxu0 %v430
    %453 = vmatmul.f32.gmra.mxu0 %v435
    %v454 = vpop.f32.mrf.mxu0
    %v455 = vadd.f32 0.0, %v454
    %456 = vdwg.mxu0
    %457 = vmatpush.msra.mxu0 0.0
    %458 = vmatpush.msra.mxu0 0.0
    %459 = vmatpush.msra.mxu0 0.0
    %460 = vmatpush.msra.mxu0 0.0
    %461 = vmatpush.msra.mxu0 0.0
    %462 = vmatpush.msra.mxu0 0.0
    %463 = vmatpush.msra.mxu0 0.0
    %464 = vmatpush.msra.mxu0 0.0
    %465 = vmatpush.msra.mxu0 0.0
    %466 = vmatpush.msra.mxu0 0.0
    %467 = vmatpush.msra.mxu0 0.0
    %468 = vmatpush.msra.mxu0 0.0
    %469 = vmatpush.msra.mxu0 0.0
    %470 = vmatpush.msra.mxu0 0.0
    %471 = vmatpush.msra.mxu0 %v433
    %472 = vmatpush.msra.mxu0 %v431
    %473 = vmatmul.f32.gmra.mxu0 %v435
    %v474 = vpop.f32.mrf.mxu0
    %v475 = vadd.f32 0.0, %v474
    %476 = vdwg.mxu0
    %v477 = vadd.f32 %v402, %v455
    %v478 = vadd.f32 %v403, %v475
    %s479 = scalar_lea.vmem %s0, 12
    %v480 = vld [vmem:[%s479] sm:$0x3]
    %v482 = vsel %vm34, %v480, 0
    %484 = vmatpush.msra.mxu0 0.0
    %485 = vmatpush.msra.mxu0 0.0
    %486 = vmatpush.msra.mxu0 0.0
    %487 = vmatpush.msra.mxu0 0.0
    %488 = vmatpush.msra.mxu0 0.0
    %489 = vmatpush.msra.mxu0 0.0
    %490 = vmatpush.msra.mxu0 0.0
    %491 = vmatpush.msra.mxu0 0.0
    %492 = vmatpush.msra.mxu0 %v28
    %493 = vmatpush.msra.mxu0 %v27
    %494 = vmatpush.msra.mxu0 %v26
    %495 = vmatpush.msra.mxu0 %v25
    %496 = vmatpush.msra.mxu0 %v24
    %497 = vmatpush.msra.mxu0 %v23
    %498 = vmatpush.msra.mxu0 %v22
    %499 = vmatpush.msra.mxu0 %v21
    %500 = vmatmul.f32.gmra.mxu0 %v482
    %v501 = vpop.f32.mrf.mxu0
    %v502 = vadd.f32 %v32, %v501
    %503 = vdwg.mxu0
    %s504 = scalar_lea.vmem %s3, 192
    %v505 = vld [vmem:[%s504] sm:$0xff]
    %v506 = vld [vmem:[%s504 + $0x8] sm:$0xff]
    %v507 = vld [vmem:[%s504 + $0x10] sm:$0xff]
    %v508 = vld [vmem:[%s504 + $0x18] sm:$0xff]
    %v510 = vsel %vm92, %v502, 0
    %512 = vmatpush.msra.mxu0 0.0
    %513 = vmatpush.msra.mxu0 0.0
    %514 = vmatpush.msra.mxu0 0.0
    %515 = vmatpush.msra.mxu0 0.0
    %516 = vmatpush.msra.mxu0 0.0
    %517 = vmatpush.msra.mxu0 0.0
    %518 = vmatpush.msra.mxu0 0.0
    %519 = vmatpush.msra.mxu0 0.0
    %520 = vmatpush.msra.mxu0 0.0
    %521 = vmatpush.msra.mxu0 0.0
    %522 = vmatpush.msra.mxu0 0.0
    %523 = vmatpush.msra.mxu0 0.0
    %524 = vmatpush.msra.mxu0 0.0
    %525 = vmatpush.msra.mxu0 0.0
    %526 = vmatpush.msra.mxu0 %v507
    %527 = vmatpush.msra.mxu0 %v505
    %528 = vmatmul.f32.gmra.mxu0 %v510
    %v529 = vpop.f32.mrf.mxu0
    %v530 = vadd.f32 0.0, %v529
    %531 = vdwg.mxu0
    %532 = vmatpush.msra.mxu0 0.0
    %533 = vmatpush.msra.mxu0 0.0
    %534 = vmatpush.msra.mxu0 0.0
    %535 = vmatpush.msra.mxu0 0.0
    %536 = vmatpush.msra.mxu0 0.0
    %537 = vmatpush.msra.mxu0 0.0
    %538 = vmatpush.msra.mxu0 0.0
    %539 = vmatpush.msra.mxu0 0.0
    %540 = vmatpush.msra.mxu0 0.0
    %541 = vmatpush.msra.mxu0 0.0
    %542 = vmatpush.msra.mxu0 0.0
    %543 = vmatpush.msra.mxu0 0.0
    %544 = vmatpush.msra.mxu0 0.0
    %545 = vmatpush.msra.mxu0 0.0
    %546 = vmatpush.msra.mxu0 %v508
    %547 = vmatpush.msra.mxu0 %v506
    %548 = vmatmul.f32.gmra.mxu0 %v510
    %v549 = vpop.f32.mrf.mxu0
    %v550 = vadd.f32 0.0, %v549
    %551 = vdwg.mxu0
    %v552 = vadd.f32 %v477, %v530
    %v553 = vadd.f32 %v478, %v550
    %s554 = scalar_lea.vmem %s0, 14
    %v555 = vld [vmem:[%s554] sm:$0x3]
    %v557 = vsel %vm34, %v555, 0
    %559 = vmatpush.msra.mxu0 0.0
    %560 = vmatpush.msra.mxu0 0.0
    %561 = vmatpush.msra.mxu0 0.0
    %562 = vmatpush.msra.mxu0 0.0
    %563 = vmatpush.msra.mxu0 0.0
    %564 = vmatpush.msra.mxu0 0.0
    %565 = vmatpush.msra.mxu0 0.0
    %566 = vmatpush.msra.mxu0 0.0
    %567 = vmatpush.msra.mxu0 %v28
    %568 = vmatpush.msra.mxu0 %v27
    %569 = vmatpush.msra.mxu0 %v26
    %570 = vmatpush.msra.mxu0 %v25
    %571 = vmatpush.msra.mxu0 %v24
    %572 = vmatpush.msra.mxu0 %v23
    %573 = vmatpush.msra.mxu0 %v22
    %574 = vmatpush.msra.mxu0 %v21
    %575 = vmatmul.f32.gmra.mxu0 %v557
    %v576 = vpop.f32.mrf.mxu0
    %v577 = vadd.f32 %v32, %v576
    %578 = vdwg.mxu0
    %s579 = scalar_lea.vmem %s3, 224
    %v580 = vld [vmem:[%s579] sm:$0xff]
    %v581 = vld [vmem:[%s579 + $0x8] sm:$0xff]
    %v582 = vld [vmem:[%s579 + $0x10] sm:$0xff]
    %v583 = vld [vmem:[%s579 + $0x18] sm:$0xff]
    %v585 = vsel %vm92, %v577, 0
    %587 = vmatpush.msra.mxu0 0.0
    %588 = vmatpush.msra.mxu0 0.0
    %589 = vmatpush.msra.mxu0 0.0
    %590 = vmatpush.msra.mxu0 0.0
    %591 = vmatpush.msra.mxu0 0.0
    %592 = vmatpush.msra.mxu0 0.0
    %593 = vmatpush.msra.mxu0 0.0
    %594 = vmatpush.msra.mxu0 0.0
    %595 = vmatpush.msra.mxu0 0.0
    %596 = vmatpush.msra.mxu0 0.0
    %597 = vmatpush.msra.mxu0 0.0
    %598 = vmatpush.msra.mxu0 0.0
    %599 = vmatpush.msra.mxu0 0.0
    %600 = vmatpush.msra.mxu0 0.0
    %601 = vmatpush.msra.mxu0 %v582
    %602 = vmatpush.msra.mxu0 %v580
    %603 = vmatmul.f32.gmra.mxu0 %v585
    %v604 = vpop.f32.mrf.mxu0
    %v605 = vadd.f32 0.0, %v604
    %606 = vdwg.mxu0
    %607 = vmatpush.msra.mxu0 0.0
    %608 = vmatpush.msra.mxu0 0.0
    %609 = vmatpush.msra.mxu0 0.0
    %610 = vmatpush.msra.mxu0 0.0
    %611 = vmatpush.msra.mxu0 0.0
    %612 = vmatpush.msra.mxu0 0.0
    %613 = vmatpush.msra.mxu0 0.0
    %614 = vmatpush.msra.mxu0 0.0
    %615 = vmatpush.msra.mxu0 0.0
    %616 = vmatpush.msra.mxu0 0.0
    %617 = vmatpush.msra.mxu0 0.0
    %618 = vmatpush.msra.mxu0 0.0
    %619 = vmatpush.msra.mxu0 0.0
    %620 = vmatpush.msra.mxu0 0.0
    %621 = vmatpush.msra.mxu0 %v583
    %622 = vmatpush.msra.mxu0 %v581
    %623 = vmatmul.f32.gmra.mxu0 %v585
    %v624 = vpop.f32.mrf.mxu0
    %v625 = vadd.f32 0.0, %v624
    %626 = vdwg.mxu0
    %v627 = vadd.f32 %v552, %v605
    %v628 = vadd.f32 %v553, %v625
    %s629 = scalar_lea.vmem %s0, 16
    %v630 = vld [vmem:[%s629] sm:$0x3]
    %v632 = vsel %vm34, %v630, 0
    %634 = vmatpush.msra.mxu0 0.0
    %635 = vmatpush.msra.mxu0 0.0
    %636 = vmatpush.msra.mxu0 0.0
    %637 = vmatpush.msra.mxu0 0.0
    %638 = vmatpush.msra.mxu0 0.0
    %639 = vmatpush.msra.mxu0 0.0
    %640 = vmatpush.msra.mxu0 0.0
    %641 = vmatpush.msra.mxu0 0.0
    %642 = vmatpush.msra.mxu0 %v28
    %643 = vmatpush.msra.mxu0 %v27
    %644 = vmatpush.msra.mxu0 %v26
    %645 = vmatpush.msra.mxu0 %v25
    %646 = vmatpush.msra.mxu0 %v24
    %647 = vmatpush.msra.mxu0 %v23
    %648 = vmatpush.msra.mxu0 %v22
    %649 = vmatpush.msra.mxu0 %v21
    %650 = vmatmul.f32.gmra.mxu0 %v632
    %v651 = vpop.f32.mrf.mxu0
    %v652 = vadd.f32 %v32, %v651
    %653 = vdwg.mxu0
    %s654 = scalar_lea.vmem %s3, 256
    %v655 = vld [vmem:[%s654] sm:$0xff]
    %v656 = vld [vmem:[%s654 + $0x8] sm:$0xff]
    %v657 = vld [vmem:[%s654 + $0x10] sm:$0xff]
    %v658 = vld [vmem:[%s654 + $0x18] sm:$0xff]
    %v660 = vsel %vm92, %v652, 0
    %662 = vmatpush.msra.mxu0 0.0
    %663 = vmatpush.msra.mxu0 0.0
    %664 = vmatpush.msra.mxu0 0.0
    %665 = vmatpush.msra.mxu0 0.0
    %666 = vmatpush.msra.mxu0 0.0
    %667 = vmatpush.msra.mxu0 0.0
    %668 = vmatpush.msra.mxu0 0.0
    %669 = vmatpush.msra.mxu0 0.0
    %670 = vmatpush.msra.mxu0 0.0
    %671 = vmatpush.msra.mxu0 0.0
    %672 = vmatpush.msra.mxu0 0.0
    %673 = vmatpush.msra.mxu0 0.0
    %674 = vmatpush.msra.mxu0 0.0
    %675 = vmatpush.msra.mxu0 0.0
    %676 = vmatpush.msra.mxu0 %v657
    %677 = vmatpush.msra.mxu0 %v655
    %678 = vmatmul.f32.gmra.mxu0 %v660
    %v679 = vpop.f32.mrf.mxu0
    %v680 = vadd.f32 0.0, %v679
    %681 = vdwg.mxu0
    %682 = vmatpush.msra.mxu0 0.0
    %683 = vmatpush.msra.mxu0 0.0
    %684 = vmatpush.msra.mxu0 0.0
    %685 = vmatpush.msra.mxu0 0.0
    %686 = vmatpush.msra.mxu0 0.0
    %687 = vmatpush.msra.mxu0 0.0
    %688 = vmatpush.msra.mxu0 0.0
    %689 = vmatpush.msra.mxu0 0.0
    %690 = vmatpush.msra.mxu0 0.0
    %691 = vmatpush.msra.mxu0 0.0
    %692 = vmatpush.msra.mxu0 0.0
    %693 = vmatpush.msra.mxu0 0.0
    %694 = vmatpush.msra.mxu0 0.0
    %695 = vmatpush.msra.mxu0 0.0
    %696 = vmatpush.msra.mxu0 %v658
    %697 = vmatpush.msra.mxu0 %v656
    %698 = vmatmul.f32.gmra.mxu0 %v660
    %v699 = vpop.f32.mrf.mxu0
    %v700 = vadd.f32 0.0, %v699
    %701 = vdwg.mxu0
    %v702 = vadd.f32 %v627, %v680
    %v703 = vadd.f32 %v628, %v700
    %v704 = vld [vmem:[%s4] sm:$0x3]
    %v706 = vperm.slane %v704, 0
    %v707 = vperm.slane %v704, 1
    %v710 = vadd.f32 %v702, %v706
    %v711 = vadd.f32 %v703, %v707
    %v712 = vxor.u32 %v710, 2147483648
    %v713 = vxor.u32 %v711, 2147483648
    %v714 = vmul.f32 %v712, 1.442695
    %v715 = vpow.pop %v714
    %v716 = vmul.f32 %v713, 1.442695
    %v717 = vpow.pop %v716
    %v718 = vadd.f32 %v715, 1.0
    %v719 = vadd.f32 %v717, 1.0
    %v720 = vrcp.pop %v718
    %v721 = vmul.f32 %v718, %v720
    %v722 = vsub.f32 1.0, %v721
    %v723 = vmul.f32 %v720, %v722
    %v724 = vadd.f32 %v720, %v723
    %vm725 = vweird.f32 %v718
    %vm726 = vweird.f32 %v720
    %vm727 = vmor %vm725, %vm726
    %v728 = vsel %vm727, %v720, %v724
    %v729 = vand.u32 2147483647, %v718
    %vm730 = vcmp.eq.f32.partialorder %v729, 8.507059e+37
    %v731 = vand.u32 %v718, 2147483648
    %v732 = vor.u32 1.1754944e-38, %v731
    %v733 = vsel %vm730, %v732, %v728
    %v734 = vmul.f32 1.0, %v733
    %v735 = vrcp.pop %v719
    %v736 = vmul.f32 %v719, %v735
    %v737 = vsub.f32 1.0, %v736
    %v738 = vmul.f32 %v735, %v737
    %v739 = vadd.f32 %v735, %v738
    %vm740 = vweird.f32 %v719
    %vm741 = vweird.f32 %v735
    %vm742 = vmor %vm740, %vm741
    %v743 = vsel %vm742, %v735, %v739
    %v744 = vand.u32 2147483647, %v719
    %vm745 = vcmp.eq.f32.partialorder %v744, 8.507059e+37
    %v746 = vand.u32 %v719, 2147483648
    %v747 = vor.u32 1.1754944e-38, %v746
    %v748 = vsel %vm745, %v747, %v743
    %v749 = vmul.f32 1.0, %v748
    %v752 = vrot.slane %v749, 6
    %vm753 = vcmask 1041408
    %v754 = vsel %vm753, %v734, %v752
    %vm756 = vcmask 912386
    %vm757 = vmor %vm756, %vm753
    %758 = vst.msk [vmem:[#allocation2] sm:$0xf] %vm757, %v754
    // Predicated region
    $region22: #{_forward_impl.1} parent=1 // pred_check
      _
    $region23: #{_forward_impl.1} parent=1 // pred_check_branch
      %760 = sbr.rel (0) target = $region25
    $region24: #{_forward_impl.1} parent=1 // pred_region
      %762 = vsyncadd [#allocation3], 0
      %s764 = sshll.u32 [#allocation2], 4
      %s765 = int_to_ptr.vmem [resolvable:$true] %s764
      %s766 = sshll.u32 %s5, 4
      %s767 = int_to_ptr.hbm [resolvable:$true] %s766
      %769 = dma.vmem_to_hbm [thread:$0]  %s765, 64, %s767, [#allocation3]
    $region25: #{_forward_impl.1} parent=1 // pred_fallthru
      _
    // Predicated region
    $region26: #{_forward_impl.1} parent=1 // pred_check
      _
    $region27: #{_forward_impl.1} parent=1 // pred_check_branch
      %771 = sbr.rel (0) target = $region29
    $region28: #{_forward_impl.1} parent=1 // pred_region
      %773 = dma.done [#allocation3], 64
    $region29: #{_forward_impl.1} parent=1 // pred_fallthru
      _
    %774 = vsyncpa [#allocation3], 1

</llo_original>
